<compile_context>
chip_gen: v7x
topology: tpu7x:2x2x1
jax: 0.10.0
libtpu: 0.0.40
codegen_flags: <defaults>
</compile_context>

<pallas_src>
import functools
import math

import jax
import jax.numpy as jnp
from jax.experimental import pallas as pl
from jax.experimental.pallas import tpu as pltpu


def _cdiv(a, b):
    return -(-a // b)


# ---------------------------------------------------------------------------
# Kernel 1: per-pixel NLL + per-tile partial stats.
#   pred_ref : (C, R, 128)  input dtype (upcast to f32 on the VPU)
#   tgt_ref  : (R, 128)     int32
#   nll_ref  : (R, 128)     f32   -- -log p_target; -1.0 sentinel for ignored /
#                                    padded pixels (valid nll is always >= 0)
#   stats_ref: (8, 128)     f32 per-tile slab of column partials:
#       row 0: count(valid & nll >= base_thr_nll)   (base-kept, i.e. p <= thresh)
#       row 1: sum(nll | base-kept)
#       row 2: count(valid)
#       row 3: sum(nll | valid)          rows 4-7: zero
# ---------------------------------------------------------------------------
def _pixel_stats_kernel(pred_ref, tgt_ref, nll_ref, stats_ref, *,
                        ignore_label, valid_rows, base_thr_nll):
    num_classes = pred_ref.shape[0]
    rows = tgt_ref.shape[0]

    tgt = tgt_ref[...]                                   # (R, 128) int32
    valid = tgt != ignore_label
    if valid_rows % rows != 0:
        # Final row-tile extends past the real data: mask out-of-bounds rows so
        # garbage reads never reach the outputs / partials.
        row_ids = (jax.lax.broadcasted_iota(jnp.int32, tgt.shape, 0)
                   + pl.program_id(1) * rows)
        valid = valid & (row_ids < valid_rows)
    tgt_c = jnp.where(valid, tgt, 0)                     # clamp ignored -> class 0

    # Numerically stable log-sum-exp over the (outer) class axis.
    # C is static -> unrolled, pure elementwise VPU/EUP work (no XLU).
    m = pred_ref[0].astype(jnp.float32)
    for ci in range(1, num_classes):
        m = jnp.maximum(m, pred_ref[ci].astype(jnp.float32))

    s = jnp.zeros_like(m)
    logit_t = jnp.zeros_like(m)
    for ci in range(num_classes):
        x = pred_ref[ci].astype(jnp.float32)
        s = s + jnp.exp(x - m)
        logit_t = jnp.where(tgt_c == ci, x, logit_t)     # single cmp+select / class

    # nll = lse - logit_t; clamp tiny negative rounding so valid nll >= 0 always
    # (the -1.0 sentinel below relies on it).
    nll = jnp.maximum((m - logit_t) + jnp.log(s), 0.0)

    # Single-map output; -1.0 sentinel marks ignored/padded pixels.
    nll_ref[...] = jnp.where(valid, nll, -1.0)

    validf = valid.astype(jnp.float32)
    nll_v = jnp.where(valid, nll, 0.0)
    base_kept = valid & (nll >= base_thr_nll)
    base_keptf = base_kept.astype(jnp.float32)

    # Direct row writes (no nested wheres); counts stay f32-exact (rows <= 4096).
    stats_ref[0:1, :] = jnp.sum(base_keptf, axis=0, keepdims=True)
    stats_ref[1:2, :] = jnp.sum(jnp.where(base_kept, nll_v, 0.0),
                                axis=0, keepdims=True)
    stats_ref[2:3, :] = jnp.sum(validf, axis=0, keepdims=True)
    stats_ref[3:4, :] = jnp.sum(nll_v, axis=0, keepdims=True)
    stats_ref[4:8, :] = jnp.zeros((4, 128), dtype=stats_ref.dtype)


# ---------------------------------------------------------------------------
# Kernel 2 (slow path only): masked reduction of the nll map with a runtime
# threshold, accumulated into a single resident (1,128) sum/count pair.
#   thr_ref : (1, 1) f32 SMEM  -- nll-space threshold (>= 0)
#   nll_ref : (R, 128) f32     -- sentinel -1.0 marks ignored/padded pixels
#   sum_ref : (1, 128) f32     -- resident accumulator (kept-nll column sums)
#   cnt_ref : (1, 128) f32     -- resident accumulator (kept column counts)
# ---------------------------------------------------------------------------
def _ohem_reduce_kernel(thr_ref, nll_ref, sum_ref, cnt_ref, *, total_rows):
    step = pl.program_id(0)

    @pl.when(step == 0)
    def _():
        sum_ref[...] = jnp.zeros_like(sum_ref)
        cnt_ref[...] = jnp.zeros_like(cnt_ref)

    thr = thr_ref[0, 0]
    nll = nll_ref[...]
    rows = nll.shape[0]
    kept = nll >= thr                    # thr >= 0, so sentinel -1.0 never kept
    if total_rows % rows != 0:
        # Final partial block may read undefined rows past the array: mask them.
        row_ids = jax.lax.broadcasted_iota(jnp.int32, nll.shape, 0) + step * rows
        kept = kept & (row_ids < total_rows)

    # NOTE: per-column f32 counts stay exact for up to 2^24 accumulated rows
    # (~2G pixels); fine for any realistic segmentation input.
    sum_ref[...] += jnp.sum(jnp.where(kept, nll, 0.0), axis=0, keepdims=True)
    cnt_ref[...] += jnp.sum(kept.astype(jnp.float32), axis=0, keepdims=True)


# ---------------------------------------------------------------------------
# Generation-aware tiling.
# ---------------------------------------------------------------------------
def _vmem_budget_and_limit():
    cap = 128 * 1024 * 1024
    try:
        info = pltpu.get_tpu_info()
        cap = int(getattr(info, "vmem_capacity_bytes", cap)) or cap
    except Exception:
        pass
    # v5e/v6e (128 MiB): limit 96 MiB, tile budget 48 MiB.
    # v7x (64 MiB / TensorCore): limit 48 MiB, tile budget 24 MiB.
    limit = min((cap * 3) // 4, 96 * 1024 * 1024)
    return limit // 2, limit


def _kernel1_rows_per_tile(num_classes, n_rows, in_itemsize, budget_bytes):
    """Rows per kernel-1 tile (pixels = rows*128) from a VMEM budget and C."""
    per_pixel = (2 * num_classes * in_itemsize   # pred block, double-buffered
                 + 2 * 4                         # int32 target, double-buffered
                 + 2 * 4                         # f32 nll output, double-buffered
                 + 4 * 4)                        # f32 temporaries (m, s, logit_t, x)
    rows = budget_bytes // (per_pixel * 128)
    rows = int(max(8, min(rows, 4096)))
    rows -= rows % 8
    if n_rows <= rows:
        return n_rows                            # one tile: block dim == full dim
    return rows


def _kernel2_rows_per_tile(total_rows, budget_bytes):
    """Kernel 2 only streams one f32 map -> much larger tile than kernel 1."""
    rows = budget_bytes // (128 * 4 * 2)         # nll block, double-buffered
    rows = int(max(8, min(rows, 32768)))
    rows -= rows % 8
    if total_rows <= rows:
        return total_rows
    return rows


# ---------------------------------------------------------------------------
# Wrapper: layout views, kernel 1, gated threshold selection + kernel 2, branch.
# ---------------------------------------------------------------------------
def prob_ohem_cross_entropy_2d(pred, target, *, ignore_label, thresh=0.6,
                               min_kept=256):
    b, c, h, w = pred.shape
    n_pix = b * h * w
    hw = h * w

    # Static nll-space threshold equivalent to `prob <= thresh`
    # (clamped >= 0: prob thresholds >= 1 keep every valid pixel).
    if thresh <= 0.0:
        base_thr_nll = float("inf")
    elif thresh >= 1.0:
        base_thr_nll = 0.0
    else:
        base_thr_nll = -math.log(float(thresh))

    pad = (-hw) % 128
    if pad:
        # TODO(synk): the ragged H*W % 128 != 0 path still materializes a padded
        # copy of pred (extra HBM traffic); avoiding it needs element-offset
        # blocking over the flat (b, c, hw) view. Common segmentation shapes
        # take the free-reshape path below.
        pred_flat = jnp.pad(pred.reshape(b, c, hw), ((0, 0), (0, 0), (0, pad)))
        tgt_flat = jnp.pad(target.reshape(b, hw).astype(jnp.int32),
                           ((0, 0), (0, pad)), constant_values=ignore_label)
    else:
        pred_flat = pred.reshape(b, c, hw)                # free reshape, no copy
        tgt_flat = target.reshape(b, hw).astype(jnp.int32)

    n_rows = (hw + pad) // 128
    pred_r = pred_flat.reshape(b, c, n_rows, 128)         # free reshape
    tgt_r = tgt_flat.reshape(b, n_rows, 128)

    budget, vmem_limit = _vmem_budget_and_limit()
    rows1 = _kernel1_rows_per_tile(c, n_rows, pred.dtype.itemsize, budget)
    grid_rows = _cdiv(n_rows, rows1)
    rows_pad = grid_rows * rows1
    grid = (b, grid_rows)

    # ---- Kernel 1: per-pixel nll + per-tile partial stats -------------------
    nll, stats = pl.pallas_call(
        functools.partial(_pixel_stats_kernel, ignore_label=ignore_label,
                          valid_rows=n_rows, base_thr_nll=base_thr_nll),
        out_shape=(
            jax.ShapeDtypeStruct((b, rows_pad, 128), jnp.float32),
            jax.ShapeDtypeStruct((b, grid_rows, 8, 128), jnp.float32),
        ),
        grid=grid,
        in_specs=[
            pl.BlockSpec((None, c, rows1, 128), lambda bi, ri: (bi, 0, ri, 0)),
            pl.BlockSpec((None, rows1, 128), lambda bi, ri: (bi, ri, 0)),
        ],
        out_specs=(
            pl.BlockSpec((None, rows1, 128), lambda bi, ri: (bi, ri, 0)),
            pl.BlockSpec((None, None, 8, 128), lambda bi, ri: (bi, ri, 0, 0)),
        ),
        compiler_params=pltpu.CompilerParams(
            dimension_semantics=("parallel", "parallel"),
            vmem_limit_bytes=vmem_limit),
    )(pred_r, tgt_r)

    # Tiny reductions over the per-tile stats slabs (counts summed as int32 for
    # exactness; per-column partials are integer-valued f32 <= 4096).
    base_cnt = jnp.sum(stats[:, :, 0, :].astype(jnp.int32))
    base_sum = jnp.sum(stats[:, :, 1, :])
    cnt_valid = jnp.sum(stats[:, :, 2, :].astype(jnp.int32))
    sum_valid = jnp.sum(stats[:, :, 3, :])

    # NOTE: if every pixel is ignored this returns 0.0 (PyTorch would give NaN).
    loss_valid = sum_valid / jnp.maximum(cnt_valid, 1).astype(jnp.float32)
    if min_kept <= 0:
        return loss_valid

    k = min(n_pix, int(min_kept))
    apply_thresh = cnt_valid >= min_kept
    # Enough hard pixels below `thresh` -> k-th smallest prob <= thresh, so the
    # OHEM threshold is exactly `thresh`: use kernel-1 partials, no top_k, no
    # second pass over the nll map.
    fast_ok = base_cnt >= k
    loss_fast = base_sum / jnp.maximum(base_cnt, 1).astype(jnp.float32)

    def _slow_branch():
        # TODO(synk): k-th-value selection has no clean Pallas equivalent; done
        # with an exact two-stage lax.top_k in nll space (k-th LARGEST nll ==
        # k-th smallest prob), gated so it only ever runs in the rare case.
        flat = nll.reshape(-1)                       # padded/ignored = -1.0
        n = flat.shape[0]
        chunk = max(k, min(n, 32768))
        n_chunks = _cdiv(n, chunk)
        pad_n = n_chunks * chunk - n
        if pad_n:
            flat = jnp.concatenate(
                [flat, jnp.full((pad_n,), -1.0, jnp.float32)])
        cand = jax.lax.top_k(flat.reshape(n_chunks, chunk), k)[0].reshape(-1)
        kth_nll = jax.lax.top_k(cand, k)[0][k - 1]
        # threshold_prob = max(thresh, kth_prob)  <=>  thr_nll = min(base, kth);
        # clamp to >= 0 so sentinel (-1.0) pixels can never be kept.
        thr_nll = jnp.maximum(
            jnp.minimum(jnp.float32(base_thr_nll), kth_nll), jnp.float32(0.0))

        total_rows = b * rows_pad
        nll2d = nll.reshape(total_rows, 128)         # free reshape
        rows2 = _kernel2_rows_per_tile(total_rows, budget)
        sum_kept, cnt_kept = pl.pallas_call(
            functools.partial(_ohem_reduce_kernel, total_rows=total_rows),
            out_shape=(jax.ShapeDtypeStruct((1, 128), jnp.float32),
                       jax.ShapeDtypeStruct((1, 128), jnp.float32)),
            grid=(_cdiv(total_rows, rows2),),
            in_specs=[
                pl.BlockSpec(memory_space=pltpu.MemorySpace.SMEM),
                pl.BlockSpec((rows2, 128), lambda r: (r, 0)),
            ],
            out_specs=(pl.BlockSpec((1, 128), lambda r: (0, 0)),
                       pl.BlockSpec((1, 128), lambda r: (0, 0))),
            compiler_params=pltpu.CompilerParams(
                dimension_semantics=("arbitrary",),
                vmem_limit_bytes=vmem_limit),
        )(thr_nll.reshape(1, 1).astype(jnp.float32), nll2d)
        s = jnp.sum(sum_kept)
        cnt = jnp.sum(cnt_kept)
        return s / jnp.maximum(cnt, 1.0)

    need_slow = jnp.logical_and(apply_thresh, jnp.logical_not(fast_ok))
    loss_slow = jax.lax.cond(need_slow, _slow_branch, lambda: jnp.float32(0.0))
    loss_kept = jnp.where(fast_ok, loss_fast, loss_slow)

    # Threshold applies only when num_valid >= min_kept (> 0); otherwise the
    # plain ignore-masked cross entropy is used (mirrors the PyTorch branches).
    return jnp.where(apply_thresh, loss_kept, loss_valid)


# ---------------------------------------------------------------------------
# Pure-JAX reference (mirrors the PyTorch forward) for a correctness check.
# ---------------------------------------------------------------------------
def _reference(pred, target, *, ignore_label, thresh, min_kept):
    b, c, h, w = pred.shape
    n = b * h * w
    tgt = target.reshape(-1).astype(jnp.int32)
    valid = tgt != ignore_label
    tgt0 = jnp.where(valid, tgt, 0)
    num_valid = jnp.sum(valid)

    logits = jnp.transpose(pred, (1, 0, 2, 3)).reshape(c, n)
    prob = jax.nn.softmax(logits, axis=0)
    idx = jnp.arange(n)
    p_t = prob[tgt0, idx]
    mask_prob = jnp.where(valid, p_t, 1.0)

    threshold = jnp.float32(thresh)
    if min_kept > 0:
        kk = min(n, int(min_kept))
        kth = jnp.sort(mask_prob)[kk - 1]
        threshold = jnp.where(kth > thresh, kth, jnp.float32(thresh))

    apply_thresh = (num_valid >= min_kept) & (num_valid > 0)
    if min_kept > 0:
        kept = valid & jnp.where(apply_thresh, mask_prob <= threshold, True)
    else:
        kept = valid

    logp = jax.nn.log_softmax(logits, axis=0)
    nll = -logp[tgt0, idx]
    return jnp.sum(nll * kept) / jnp.maximum(jnp.sum(kept), 1)


if __name__ == "__main__":
    key = jax.random.PRNGKey(0)
    k1, k2, k3 = jax.random.split(key, 3)

    B, C, H, W = 2, 4, 16, 16
    IGNORE = 255

    pred = jax.random.normal(k1, (B, C, H, W), jnp.float32)
    target = jax.random.randint(k2, (B, H, W), 0, C).astype(jnp.int32)
    drop = jax.random.uniform(k3, (B, H, W)) < 0.1
    target = jnp.where(drop, IGNORE, target)

    configs = [
        dict(thresh=0.6, min_kept=64),    # common fast path: no top_k, no 2nd pass
        dict(thresh=0.02, min_kept=64),   # slow path: top_k + reduce kernel
        dict(thresh=0.6, min_kept=600),   # min_kept > num_valid: plain masked CE
    ]
    for cfg in configs:
        loss = prob_ohem_cross_entropy_2d(pred, target, ignore_label=IGNORE, **cfg)
        loss = jax.block_until_ready(loss)
        ref = _reference(pred, target, ignore_label=IGNORE, **cfg)
        assert jnp.isfinite(loss), ("loss is not finite", cfg)
        assert jnp.allclose(loss, ref, rtol=1e-3, atol=1e-4), (cfg, float(loss), float(ref))

    print("KERNEL_OK")
</pallas_src>

<mosaic_0001>
module attributes {stable_mosaic.version = 11 : i64} {
  func.func @_pixel_stats_kernel(%arg0: i32, %arg1: i32, %arg2: memref<1x4x2x128xf32, #tpu.memory_space<vmem>>, %arg3: memref<1x2x128xi32, #tpu.memory_space<vmem>>, %arg4: memref<1x2x128xf32, #tpu.memory_space<vmem>>, %arg5: memref<1x1x8x128xf32, #tpu.memory_space<vmem>>) attributes {dimension_semantics = [#tpu.dimension_semantics<parallel>, #tpu.dimension_semantics<parallel>], iteration_bounds = array<i64: 2, 1>, scalar_prefetch = 0 : i64, scratch_operands = 0 : i64, tpu.core_type = #tpu.core_type<tc>, window_params = [{transform_indices = @transform_0, window_bounds = array<i64: 1, 4, 2, 128>}, {transform_indices = @transform_1, window_bounds = array<i64: 1, 2, 128>}, {transform_indices = @transform_2, window_bounds = array<i64: 1, 2, 128>}, {transform_indices = @transform_3, window_bounds = array<i64: 1, 1, 8, 128>}]} {
    %c0 = arith.constant 0 : index
    %c0_0 = arith.constant 0 : index
    %c0_1 = arith.constant 0 : index
    %0 = vector.load %arg3[%c0, %c0_0, %c0_1] : memref<1x2x128xi32, #tpu.memory_space<vmem>>, vector<1x2x128xi32>
    %1 = vector.shape_cast %0 : vector<1x2x128xi32> to vector<2x128xi32>
    %c255_i32 = arith.constant 255 : i32
    %2 = vector.broadcast %c255_i32 : i32 to vector<2x128xi32>
    %3 = arith.cmpi ne, %1, %2 : vector<2x128xi32>
    %c0_i32 = arith.constant 0 : i32
    %4 = vector.broadcast %c0_i32 : i32 to vector<2x128xi32>
    %5 = arith.select %3, %1, %4 : vector<2x128xi1>, vector<2x128xi32>
    %c0_2 = arith.constant 0 : index
    %c0_3 = arith.constant 0 : index
    %c0_4 = arith.constant 0 : index
    %c0_5 = arith.constant 0 : index
    %6 = vector.load %arg2[%c0_2, %c0_3, %c0_4, %c0_5] : memref<1x4x2x128xf32, #tpu.memory_space<vmem>>, vector<1x1x2x128xf32>
    %7 = vector.shape_cast %6 : vector<1x1x2x128xf32> to vector<2x128xf32>
    %c0_6 = arith.constant 0 : index
    %c1 = arith.constant 1 : index
    %c0_7 = arith.constant 0 : index
    %c0_8 = arith.constant 0 : index
    %8 = vector.load %arg2[%c0_6, %c1, %c0_7, %c0_8] : memref<1x4x2x128xf32, #tpu.memory_space<vmem>>, vector<1x1x2x128xf32>
    %9 = vector.shape_cast %8 : vector<1x1x2x128xf32> to vector<2x128xf32>
    %10 = arith.maximumf %7, %9 : vector<2x128xf32>
    %c0_9 = arith.constant 0 : index
    %c2 = arith.constant 2 : index
    %c0_10 = arith.constant 0 : index
    %c0_11 = arith.constant 0 : index
    %11 = vector.load %arg2[%c0_9, %c2, %c0_10, %c0_11] : memref<1x4x2x128xf32, #tpu.memory_space<vmem>>, vector<1x1x2x128xf32>
    %12 = vector.shape_cast %11 : vector<1x1x2x128xf32> to vector<2x128xf32>
    %13 = arith.maximumf %10, %12 : vector<2x128xf32>
    %c0_12 = arith.constant 0 : index
    %c3 = arith.constant 3 : index
    %c0_13 = arith.constant 0 : index
    %c0_14 = arith.constant 0 : index
    %14 = vector.load %arg2[%c0_12, %c3, %c0_13, %c0_14] : memref<1x4x2x128xf32, #tpu.memory_space<vmem>>, vector<1x1x2x128xf32>
    %15 = vector.shape_cast %14 : vector<1x1x2x128xf32> to vector<2x128xf32>
    %16 = arith.maximumf %13, %15 : vector<2x128xf32>
    %cst = arith.constant 0.000000e+00 : f32
    %17 = vector.broadcast %cst : f32 to vector<2x128xf32>
    %cst_15 = arith.constant 0.000000e+00 : f32
    %18 = vector.broadcast %cst_15 : f32 to vector<2x128xf32>
    %c0_16 = arith.constant 0 : index
    %c0_17 = arith.constant 0 : index
    %c0_18 = arith.constant 0 : index
    %c0_19 = arith.constant 0 : index
    %19 = vector.load %arg2[%c0_16, %c0_17, %c0_18, %c0_19] : memref<1x4x2x128xf32, #tpu.memory_space<vmem>>, vector<1x1x2x128xf32>
    %20 = vector.shape_cast %19 : vector<1x1x2x128xf32> to vector<2x128xf32>
    %21 = arith.subf %20, %16 : vector<2x128xf32>
    %22 = math.exp %21 : vector<2x128xf32>
    %23 = arith.addf %17, %22 : vector<2x128xf32>
    %c0_i32_20 = arith.constant 0 : i32
    %24 = vector.broadcast %c0_i32_20 : i32 to vector<2x128xi32>
    %25 = arith.cmpi eq, %5, %24 : vector<2x128xi32>
    %26 = arith.select %25, %20, %18 : vector<2x128xi1>, vector<2x128xf32>
    %c0_21 = arith.constant 0 : index
    %c1_22 = arith.constant 1 : index
    %c0_23 = arith.constant 0 : index
    %c0_24 = arith.constant 0 : index
    %27 = vector.load %arg2[%c0_21, %c1_22, %c0_23, %c0_24] : memref<1x4x2x128xf32, #tpu.memory_space<vmem>>, vector<1x1x2x128xf32>
    %28 = vector.shape_cast %27 : vector<1x1x2x128xf32> to vector<2x128xf32>
    %29 = arith.subf %28, %16 : vector<2x128xf32>
    %30 = math.exp %29 : vector<2x128xf32>
    %31 = arith.addf %23, %30 : vector<2x128xf32>
    %c1_i32 = arith.constant 1 : i32
    %32 = vector.broadcast %c1_i32 : i32 to vector<2x128xi32>
    %33 = arith.cmpi eq, %5, %32 : vector<2x128xi32>
    %34 = arith.select %33, %28, %26 : vector<2x128xi1>, vector<2x128xf32>
    %c0_25 = arith.constant 0 : index
    %c2_26 = arith.constant 2 : index
    %c0_27 = arith.constant 0 : index
    %c0_28 = arith.constant 0 : index
    %35 = vector.load %arg2[%c0_25, %c2_26, %c0_27, %c0_28] : memref<1x4x2x128xf32, #tpu.memory_space<vmem>>, vector<1x1x2x128xf32>
    %36 = vector.shape_cast %35 : vector<1x1x2x128xf32> to vector<2x128xf32>
    %37 = arith.subf %36, %16 : vector<2x128xf32>
    %38 = math.exp %37 : vector<2x128xf32>
    %39 = arith.addf %31, %38 : vector<2x128xf32>
    %c2_i32 = arith.constant 2 : i32
    %40 = vector.broadcast %c2_i32 : i32 to vector<2x128xi32>
    %41 = arith.cmpi eq, %5, %40 : vector<2x128xi32>
    %42 = arith.select %41, %36, %34 : vector<2x128xi1>, vector<2x128xf32>
    %c0_29 = arith.constant 0 : index
    %c3_30 = arith.constant 3 : index
    %c0_31 = arith.constant 0 : index
    %c0_32 = arith.constant 0 : index
    %43 = vector.load %arg2[%c0_29, %c3_30, %c0_31, %c0_32] : memref<1x4x2x128xf32, #tpu.memory_space<vmem>>, vector<1x1x2x128xf32>
    %44 = vector.shape_cast %43 : vector<1x1x2x128xf32> to vector<2x128xf32>
    %45 = arith.subf %44, %16 : vector<2x128xf32>
    %46 = math.exp %45 : vector<2x128xf32>
    %47 = arith.addf %39, %46 : vector<2x128xf32>
    %c3_i32 = arith.constant 3 : i32
    %48 = vector.broadcast %c3_i32 : i32 to vector<2x128xi32>
    %49 = arith.cmpi eq, %5, %48 : vector<2x128xi32>
    %50 = arith.select %49, %44, %42 : vector<2x128xi1>, vector<2x128xf32>
    %51 = arith.subf %16, %50 : vector<2x128xf32>
    %52 = math.log %47 : vector<2x128xf32>
    %53 = arith.addf %51, %52 : vector<2x128xf32>
    %cst_33 = arith.constant 0.000000e+00 : f32
    %54 = vector.broadcast %cst_33 : f32 to vector<2x128xf32>
    %55 = arith.maximumf %53, %54 : vector<2x128xf32>
    %cst_34 = arith.constant -1.000000e+00 : f32
    %56 = vector.broadcast %cst_34 : f32 to vector<2x128xf32>
    %57 = arith.select %3, %55, %56 : vector<2x128xi1>, vector<2x128xf32>
    %c0_35 = arith.constant 0 : index
    %c0_36 = arith.constant 0 : index
    %c0_37 = arith.constant 0 : index
    %58 = vector.load %arg4[%c0_35, %c0_36, %c0_37] : memref<1x2x128xf32, #tpu.memory_space<vmem>>, vector<1x2x128xf32>
    %59 = vector.shape_cast %58 : vector<1x2x128xf32> to vector<2x128xf32>
    %60 = vector.shape_cast %57 : vector<2x128xf32> to vector<1x2x128xf32>
    tpu.vector_store %arg4[%c0_35, %c0_36, %c0_37], %60 {strides = array<i32>} : memref<1x2x128xf32, #tpu.memory_space<vmem>>, vector<1x2x128xf32>,
    %61 = arith.extui %3 : vector<2x128xi1> to vector<2x128xi32>
    %62 = arith.sitofp %61 : vector<2x128xi32> to vector<2x128xf32>
    %cst_38 = arith.constant 0.000000e+00 : f32
    %63 = vector.broadcast %cst_38 : f32 to vector<2x128xf32>
    %64 = arith.select %3, %55, %63 : vector<2x128xi1>, vector<2x128xf32>
    %cst_39 = arith.constant 0.510825634 : f32
    %65 = vector.broadcast %cst_39 : f32 to vector<2x128xf32>
    %66 = arith.cmpf oge, %55, %65 : vector<2x128xf32>
    %67 = arith.andi %3, %66 : vector<2x128xi1>
    %68 = arith.extui %67 : vector<2x128xi1> to vector<2x128xi32>
    %69 = arith.sitofp %68 : vector<2x128xi32> to vector<2x128xf32>
    %cst_40 = arith.constant dense<0.000000e+00> : vector<128xf32>
    %70 = vector.multi_reduction <add>, %69, %cst_40 [0] : vector<2x128xf32> to vector<128xf32>
    %71 = vector.shape_cast %70 : vector<128xf32> to vector<1x128xf32>
    %c0_41 = arith.constant 0 : index
    %c0_42 = arith.constant 0 : index
    %c0_43 = arith.constant 0 : index
    %c0_44 = arith.constant 0 : index
    %72 = vector.load %arg5[%c0_41, %c0_42, %c0_43, %c0_44] : memref<1x1x8x128xf32, #tpu.memory_space<vmem>>, vector<1x1x1x128xf32>
    %73 = vector.shape_cast %72 : vector<1x1x1x128xf32> to vector<1x128xf32>
    %74 = vector.shape_cast %71 : vector<1x128xf32> to vector<1x1x1x128xf32>
    tpu.vector_store %arg5[%c0_41, %c0_42, %c0_43, %c0_44], %74 {strides = array<i32>} : memref<1x1x8x128xf32, #tpu.memory_space<vmem>>, vector<1x1x1x128xf32>,
    %cst_45 = arith.constant 0.000000e+00 : f32
    %75 = vector.broadcast %cst_45 : f32 to vector<2x128xf32>
    %76 = arith.select %67, %64, %75 : vector<2x128xi1>, vector<2x128xf32>
    %cst_46 = arith.constant dense<0.000000e+00> : vector<128xf32>
    %77 = vector.multi_reduction <add>, %76, %cst_46 [0] : vector<2x128xf32> to vector<128xf32>
    %78 = vector.shape_cast %77 : vector<128xf32> to vector<1x128xf32>
    %c0_47 = arith.constant 0 : index
    %c0_48 = arith.constant 0 : index
    %c1_49 = arith.constant 1 : index
    %c0_50 = arith.constant 0 : index
    %79 = vector.load %arg5[%c0_47, %c0_48, %c1_49, %c0_50] : memref<1x1x8x128xf32, #tpu.memory_space<vmem>>, vector<1x1x1x128xf32>
    %80 = vector.shape_cast %79 : vector<1x1x1x128xf32> to vector<1x128xf32>
    %81 = vector.shape_cast %78 : vector<1x128xf32> to vector<1x1x1x128xf32>
    tpu.vector_store %arg5[%c0_47, %c0_48, %c1_49, %c0_50], %81 {strides = array<i32>} : memref<1x1x8x128xf32, #tpu.memory_space<vmem>>, vector<1x1x1x128xf32>,
    %cst_51 = arith.constant dense<0.000000e+00> : vector<128xf32>
    %82 = vector.multi_reduction <add>, %62, %cst_51 [0] : vector<2x128xf32> to vector<128xf32>
    %83 = vector.shape_cast %82 : vector<128xf32> to vector<1x128xf32>
    %c0_52 = arith.constant 0 : index
    %c0_53 = arith.constant 0 : index
    %c2_54 = arith.constant 2 : index
    %c0_55 = arith.constant 0 : index
    %84 = vector.load %arg5[%c0_52, %c0_53, %c2_54, %c0_55] : memref<1x1x8x128xf32, #tpu.memory_space<vmem>>, vector<1x1x1x128xf32>
    %85 = vector.shape_cast %84 : vector<1x1x1x128xf32> to vector<1x128xf32>
    %86 = vector.shape_cast %83 : vector<1x128xf32> to vector<1x1x1x128xf32>
    tpu.vector_store %arg5[%c0_52, %c0_53, %c2_54, %c0_55], %86 {strides = array<i32>} : memref<1x1x8x128xf32, #tpu.memory_space<vmem>>, vector<1x1x1x128xf32>,
    %cst_56 = arith.constant dense<0.000000e+00> : vector<128xf32>
    %87 = vector.multi_reduction <add>, %64, %cst_56 [0] : vector<2x128xf32> to vector<128xf32>
    %88 = vector.shape_cast %87 : vector<128xf32> to vector<1x128xf32>
    %c0_57 = arith.constant 0 : index
    %c0_58 = arith.constant 0 : index
    %c3_59 = arith.constant 3 : index
    %c0_60 = arith.constant 0 : index
    %89 = vector.load %arg5[%c0_57, %c0_58, %c3_59, %c0_60] : memref<1x1x8x128xf32, #tpu.memory_space<vmem>>, vector<1x1x1x128xf32>
    %90 = vector.shape_cast %89 : vector<1x1x1x128xf32> to vector<1x128xf32>
    %91 = vector.shape_cast %88 : vector<1x128xf32> to vector<1x1x1x128xf32>
    tpu.vector_store %arg5[%c0_57, %c0_58, %c3_59, %c0_60], %91 {strides = array<i32>} : memref<1x1x8x128xf32, #tpu.memory_space<vmem>>, vector<1x1x1x128xf32>,
    %cst_61 = arith.constant 0.000000e+00 : f32
    %92 = vector.broadcast %cst_61 : f32 to vector<4x128xf32>
    %c0_62 = arith.constant 0 : index
    %c0_63 = arith.constant 0 : index
    %c4 = arith.constant 4 : index
    %c0_64 = arith.constant 0 : index
    %93 = vector.load %arg5[%c0_62, %c0_63, %c4, %c0_64] : memref<1x1x8x128xf32, #tpu.memory_space<vmem>>, vector<1x1x4x128xf32>
    %94 = vector.shape_cast %93 : vector<1x1x4x128xf32> to vector<4x128xf32>
    %95 = vector.shape_cast %92 : vector<4x128xf32> to vector<1x1x4x128xf32>
    tpu.vector_store %arg5[%c0_62, %c0_63, %c4, %c0_64], %95 {strides = array<i32>} : memref<1x1x8x128xf32, #tpu.memory_space<vmem>>, vector<1x1x4x128xf32>,
    return
  }
  func.func @transform_0(%arg0: i32, %arg1: i32) -> (i32, i32, i32, i32) {
    %c0_i32 = arith.constant 0 : i32
    %c0_i32_0 = arith.constant 0 : i32
    %c0_i32_1 = arith.constant 0 : i32
    return %arg0, %c0_i32, %arg1, %c0_i32_0 : i32, i32, i32, i32
  }
  func.func @transform_1(%arg0: i32, %arg1: i32) -> (i32, i32, i32) {
    %c0_i32 = arith.constant 0 : i32
    %c0_i32_0 = arith.constant 0 : i32
    return %arg0, %arg1, %c0_i32 : i32, i32, i32
  }
  func.func @transform_2(%arg0: i32, %arg1: i32) -> (i32, i32, i32) {
    %c0_i32 = arith.constant 0 : i32
    %c0_i32_0 = arith.constant 0 : i32
    return %arg0, %arg1, %c0_i32 : i32, i32, i32
  }
  func.func @transform_3(%arg0: i32, %arg1: i32) -> (i32, i32, i32, i32) {
    %c0_i32 = arith.constant 0 : i32
    %c0_i32_0 = arith.constant 0 : i32
    %c0_i32_1 = arith.constant 0 : i32
    return %arg0, %arg1, %c0_i32, %c0_i32_0 : i32, i32, i32, i32
  }
}

</mosaic_0001>

<llo_original>
// kernel: tpu_custom_call.1
$region0: #{tpu_custom_call.1}
  #allocation0 [shape = 'u32[]', space=smem, size = 0x4, offset = 0x4, fixed_abs, tag = 'smem constant byte address 0x4 - core index']
  #allocation1 [shape = 'u32[144,128]{1,0:T(1,128)}', space=vmem, size = 0x12000, scoped, tag = 'internal scratch']
  %s0 = inlined_call_operand.hbm [shape: f32[2,4,2,128], index: 0, kind: input, shape index: {}]
  %s1 = inlined_call_operand.hbm [shape: s32[2,2,128], index: 1, kind: input, shape index: {}]
  %s2 = inlined_call_operand.hbm [shape: f32[2,2,128], index: 2, kind: output, shape index: {0}]
  %s3 = inlined_call_operand.hbm [shape: f32[2,1,8,128], index: 3, kind: output, shape index: {1}]
  %4 = xla_tuple %s2, %s3
  %s5 = sld [smem:[#allocation0]]
  $region57: #{tpu_custom_call.1} parent=0
    _
  %s7 = ssub.s32 1, %s5
  %s8 = scalar_select 0, %s7, %s5
  $region1: #{tpu_custom_call.1} parent=0
    #allocation2 [shape = 'u8[8192]{0}', space=vmem, size = 0x2000, scoped, tag = 'input window, operand 0']
    #allocation3 [shape = 's32[2]{0}', space=sflag, size = 0x8, scoped, tag = 'scoped memory for tpu_custom_call.1']
    #allocation4 [shape = 's32[2]{0}', space=sflag, size = 0x8, scoped, tag = 'scoped memory for tpu_custom_call.1']
    #allocation5 [shape = 'u8[2048]{0}', space=vmem, size = 0x800, scoped, tag = 'input window, operand 1']
    #allocation6 [shape = 's32[2]{0}', space=sflag, size = 0x8, scoped, tag = 'scoped memory for tpu_custom_call.1']
    #allocation7 [shape = 'u8[2048]{0}', space=vmem, size = 0x800, scoped, tag = 'output window, operand 0']
    #allocation8 [shape = 'u8[8192]{0}', space=vmem, size = 0x2000, scoped, tag = 'output window, operand 1']
    #allocation9 [shape = 's32[2]{0}', space=sflag, size = 0x8, scoped, tag = 'scoped memory for tpu_custom_call.1']
    %9 = vsyncpa [#allocation3], 0
    %s10 = scalar_lea.sflag [#allocation3], 1
    %11 = vsyncpa %s10, 0
    %12 = vsyncpa [#allocation6], 0
    %s13 = scalar_lea.sflag [#allocation6], 1
    %14 = vsyncpa %s13, 0
    %15 = vsyncpa [#allocation4], 0
    %s16 = scalar_lea.sflag [#allocation4], 1
    %17 = vsyncpa %s16, 0
    %18 = vsyncpa [#allocation9], 0
    %s19 = scalar_lea.sflag [#allocation9], 1
    %20 = vsyncpa %s19, 0
    loop: start=0, step=1, limit=4
    $region2: #{tpu_custom_call.1} parent=1 // loop_pre_header
      _
    $region3: #{tpu_custom_call.1} parent=1 // loop_header
      %s22 = sphi 0, %s26
      %p23 = scmp.ge.s32.totalorder %s22, 4
      %s29 = sphi 0, %s41
      %s30 = sphi 0, %s37
      %s31 = sphi 0, %s29
      %s32 = sphi 0, %s30
      %s33 = sphi 0, %s31
      %s34 = sphi 0, %s32
      %s46 = sphi 0, %s48
      %s49 = sphi 0, %s46
      %s50 = sphi 0, %s49
      %s66 = sphi 0, %s50
      %s74 = sphi 0, %s76
      %s77 = sphi 0, %s74
      %s78 = sphi 0, %s77
      %s94 = sphi 0, %s78
      %s102 = sphi 0, %s104
      %s105 = sphi 0, %s102
      %s106 = sphi 0, %s105
      %s122 = sphi 0, %s106
      %s130 = sphi 0, %s132
      %s133 = sphi 0, %s130
      %s134 = sphi 0, %s133
      %s150 = sphi 0, %s134
    $region4: #{tpu_custom_call.1} parent=1 // loop_header_branch
      %25 = sbr.rel (%p23) target = $region8
    $region5: #{tpu_custom_call.1} parent=1 // loop_body
      %s27 = ssub.s32 %s22, 1
      %s28 = ssub.s32 %s22, 2
      %s35 = sadd.s32 1, %s30
      %p36 = scmp.ge.s32.totalorder %s35, 1
      %s37 = scalar_select %p36, 0, %s35
      %s38 = sadd.s32 1, %s29
      %s39 = scalar_select %p36, %s38, %s29
      %p40 = scmp.ge.s32.totalorder %s39, 2
      %s41 = scalar_select %p40, 0, %s39
      %s42 = ssub.s32 %s29, %s41
      %s43 = ssub.s32 %s30, %s37
      %s44 = sor.u32 %s42, %s43
      %p45 = scmp.eq.s32.totalorder %s44, 0
      %s47 = sadd.s32 %s46, 1
      %s48 = scalar_select %p45, %s46, %s47
      %p51 = pneg %p45
      %p52 = scmp.eq.s32.totalorder %s22, 1
      %p53 = por %p51, %p52
      %p54 = scmp.ne.s32.totalorder %s46, %s49
      %p55 = scmp.eq.s32.totalorder %s22, 0
      %p56 = por %p54, %p55
      %p57 = scmp.ne.s32.totalorder %s46, %s49
      %p58 = scmp.eq.s32.totalorder %s27, 1
      %p59 = por %p57, %p58
      %p60 = scmp.ne.s32.totalorder %s49, %s50
      %p61 = scmp.eq.s32.totalorder %s27, 0
      %p62 = por %p60, %p61
      %p63 = scmp.ne.s32.totalorder %s49, %s50
      %p64 = scmp.eq.s32.totalorder %s28, 1
      %p65 = por %p63, %p64
      %p67 = scmp.ne.s32.totalorder %s50, %s66
      %p68 = scmp.eq.s32.totalorder %s28, 0
      %p69 = por %p67, %p68
      %s70 = ssub.s32 %s29, %s41
      %s71 = ssub.s32 %s30, %s37
      %s72 = sor.u32 %s70, %s71
      %p73 = scmp.eq.s32.totalorder %s72, 0
      %s75 = sadd.s32 %s74, 1
      %s76 = scalar_select %p73, %s74, %s75
      %p79 = pneg %p73
      %p80 = scmp.eq.s32.totalorder %s22, 1
      %p81 = por %p79, %p80
      %p82 = scmp.ne.s32.totalorder %s74, %s77
      %p83 = scmp.eq.s32.totalorder %s22, 0
      %p84 = por %p82, %p83
      %p85 = scmp.ne.s32.totalorder %s74, %s77
      %p86 = scmp.eq.s32.totalorder %s27, 1
      %p87 = por %p85, %p86
      %p88 = scmp.ne.s32.totalorder %s77, %s78
      %p89 = scmp.eq.s32.totalorder %s27, 0
      %p90 = por %p88, %p89
      %p91 = scmp.ne.s32.totalorder %s77, %s78
      %p92 = scmp.eq.s32.totalorder %s28, 1
      %p93 = por %p91, %p92
      %p95 = scmp.ne.s32.totalorder %s78, %s94
      %p96 = scmp.eq.s32.totalorder %s28, 0
      %p97 = por %p95, %p96
      %s98 = ssub.s32 %s29, %s41
      %s99 = ssub.s32 %s30, %s37
      %s100 = sor.u32 %s98, %s99
      %p101 = scmp.eq.s32.totalorder %s100, 0
      %s103 = sadd.s32 %s102, 1
      %s104 = scalar_select %p101, %s102, %s103
      %p107 = pneg %p101
      %p108 = scmp.eq.s32.totalorder %s22, 1
      %p109 = por %p107, %p108
      %p110 = scmp.ne.s32.totalorder %s102, %s105
      %p111 = scmp.eq.s32.totalorder %s22, 0
      %p112 = por %p110, %p111
      %p113 = scmp.ne.s32.totalorder %s102, %s105
      %p114 = scmp.eq.s32.totalorder %s27, 1
      %p115 = por %p113, %p114
      %p116 = scmp.ne.s32.totalorder %s105, %s106
      %p117 = scmp.eq.s32.totalorder %s27, 0
      %p118 = por %p116, %p117
      %p119 = scmp.ne.s32.totalorder %s105, %s106
      %p120 = scmp.eq.s32.totalorder %s28, 1
      %p121 = por %p119, %p120
      %p123 = scmp.ne.s32.totalorder %s106, %s122
      %p124 = scmp.eq.s32.totalorder %s28, 0
      %p125 = por %p123, %p124
      %s126 = ssub.s32 %s29, %s41
      %s127 = ssub.s32 %s30, %s37
      %s128 = sor.u32 %s126, %s127
      %p129 = scmp.eq.s32.totalorder %s128, 0
      %s131 = sadd.s32 %s130, 1
      %s132 = scalar_select %p129, %s130, %s131
      %p135 = pneg %p129
      %p136 = scmp.eq.s32.totalorder %s22, 1
      %p137 = por %p135, %p136
      %p138 = scmp.ne.s32.totalorder %s130, %s133
      %p139 = scmp.eq.s32.totalorder %s22, 0
      %p140 = por %p138, %p139
      %p141 = scmp.ne.s32.totalorder %s130, %s133
      %p142 = scmp.eq.s32.totalorder %s27, 1
      %p143 = por %p141, %p142
      %p144 = scmp.ne.s32.totalorder %s133, %s134
      %p145 = scmp.eq.s32.totalorder %s27, 0
      %p146 = por %p144, %p145
      %p147 = scmp.ne.s32.totalorder %s133, %s134
      %p148 = scmp.eq.s32.totalorder %s28, 1
      %p149 = por %p147, %p148
      %p151 = scmp.ne.s32.totalorder %s134, %s150
      %p152 = scmp.eq.s32.totalorder %s28, 0
      %p153 = por %p151, %p152
      %p154 = scmp.le.s32.totalorder 1, %s22
      %p155 = scmp.lt.s32.totalorder %s22, 3
      %p156 = pnand %p154, %p155
      %p157 = pneg %p156
      // Predicated region
      $region9: #{tpu_custom_call.1} parent=5 // pred_check
        _
      $region10: #{tpu_custom_call.1} parent=5 // pred_check_branch
        %159 = sbr.rel (%p156) target = $region12
      $region11: #{tpu_custom_call.1} parent=5 // pred_region
        %s160 = ssub.s32 %s22, 1
      $region12: #{tpu_custom_call.1} parent=5 // pred_fallthru
        _
      %p161 = scmp.lt.s32.totalorder %s22, 2
      // Predicated region
      $region13: #{tpu_custom_call.1} parent=5 // pred_check
        %p162 = pneg %p161
      $region14: #{tpu_custom_call.1} parent=5 // pred_check_branch
        %164 = sbr.rel (%p162) target = $region16
      $region15: #{tpu_custom_call.1} parent=5 // pred_region
        // Predicated region
        $region17: #{tpu_custom_call.1} parent=15 // pred_check
          %p165 = pneg %p56
        $region18: #{tpu_custom_call.1} parent=15 // pred_check_branch
          %167 = sbr.rel (%p165) target = $region20
        $region19: #{tpu_custom_call.1} parent=15 // pred_region
          %s168 = sand.u32 %s46, 1
          %s169 = scalar_lea.sflag [#allocation3], %s168
          %s170 = sand.u32 %s46, 1
          %s171 = smul.addr %s170, 8
          %s172 = scalar_lea.vmem [#allocation2], %s171
          %s174 = ssub.s32 128, 128
          %175 = vsyncadd %s169, %s174
          %s176 = smul.addr %s29, 4
          %s177 = sadd.s32 %s30, %s176
          %s178 = smul.addr %s177, 32
          %s179 = scalar_lea.hbm %s0, %s178
          %s180 = sshll.u32 %s172, 4
          %s181 = int_to_ptr.vmem [resolvable:$true] %s180
          %186 = dma.hbm_to_vmem [thread:$0]  %s179, 128, %s181, %s169, 32, 32, 2
        $region20: #{tpu_custom_call.1} parent=15 // pred_fallthru
          _
        // Predicated region
        $region21: #{tpu_custom_call.1} parent=15 // pred_check
          %p187 = pneg %p84
        $region22: #{tpu_custom_call.1} parent=15 // pred_check_branch
          %189 = sbr.rel (%p187) target = $region24
        $region23: #{tpu_custom_call.1} parent=15 // pred_region
          %s190 = sand.u32 %s74, 1
          %s191 = scalar_lea.sflag [#allocation6], %s190
          %s192 = sand.u32 %s74, 1
          %s193 = smul.addr %s192, 2
          %s194 = scalar_lea.vmem [#allocation5], %s193
          %s196 = ssub.s32 32, 32
          %197 = vsyncadd %s191, %s196
          %s198 = sadd.s32 %s30, %s29
          %s199 = smul.addr %s198, 32
          %s200 = scalar_lea.hbm %s1, %s199
          %s202 = sshll.u32 %s194, 4
          %s203 = int_to_ptr.vmem [resolvable:$true] %s202
          %205 = dma.hbm_to_vmem [thread:$0]  %s200, 32, %s203, %s191
        $region24: #{tpu_custom_call.1} parent=15 // pred_fallthru
          _
      $region16: #{tpu_custom_call.1} parent=5 // pred_fallthru
        _
      %p206 = scmp.le.s32.totalorder 1, %s22
      %p207 = scmp.lt.s32.totalorder %s22, 3
      %p208 = pnand %p206, %p207
      %p209 = pneg %p208
      // Predicated region
      $region25: #{tpu_custom_call.1} parent=5 // pred_check
        _
      $region26: #{tpu_custom_call.1} parent=5 // pred_check_branch
        %211 = sbr.rel (%p208) target = $region28
      $region27: #{tpu_custom_call.1} parent=5 // pred_region
        %s212 = ssub.s32 %s22, 1
        %s213 = sand.u32 %s49, 1
        %s214 = scalar_lea.sflag [#allocation3], %s213
        %s215 = sand.u32 %s49, 1
        %s216 = smul.addr %s215, 8
        %s217 = scalar_lea.vmem [#allocation2], %s216
        // Predicated region
        $region29: #{tpu_custom_call.1} parent=27 // pred_check
          %p218 = pneg %p62
        $region30: #{tpu_custom_call.1} parent=27 // pred_check_branch
          %220 = sbr.rel (%p218) target = $region32
        $region31: #{tpu_custom_call.1} parent=27 // pred_region
          %221 = dma.done %s214, 128
        $region32: #{tpu_custom_call.1} parent=27 // pred_fallthru
          _
        %s222 = sand.u32 %s77, 1
        %s223 = scalar_lea.sflag [#allocation6], %s222
        %s224 = sand.u32 %s77, 1
        %s225 = smul.addr %s224, 2
        %s226 = scalar_lea.vmem [#allocation5], %s225
        // Predicated region
        $region33: #{tpu_custom_call.1} parent=27 // pred_check
          %p227 = pneg %p90
        $region34: #{tpu_custom_call.1} parent=27 // pred_check_branch
          %229 = sbr.rel (%p227) target = $region36
        $region35: #{tpu_custom_call.1} parent=27 // pred_region
          %230 = dma.done %s223, 32
        $region36: #{tpu_custom_call.1} parent=27 // pred_fallthru
          _
        %s231 = sand.u32 %s49, 1
        %s232 = scalar_lea.sflag [#allocation3], %s231
        %s233 = sand.u32 %s49, 1
        %s234 = smul.addr %s233, 8
        %s235 = scalar_lea.vmem [#allocation2], %s234
        %p236 = pneg %p62
        %p237 = pneg %p59
        %s238 = sand.u32 %s77, 1
        %s239 = scalar_lea.sflag [#allocation6], %s238
        %s240 = sand.u32 %s77, 1
        %s241 = smul.addr %s240, 2
        %s242 = scalar_lea.vmem [#allocation5], %s241
        %p243 = pneg %p90
        %p244 = pneg %p87
        %p245 = pneg %p118
        %p246 = pneg %p115
        %s247 = sand.u32 %s105, 1
        %s248 = scalar_lea.sflag [#allocation4], %s247
        %s249 = sand.u32 %s105, 1
        %s250 = smul.addr %s249, 2
        %s251 = scalar_lea.vmem [#allocation7], %s250
        %p252 = pneg %p146
        %p253 = pneg %p143
        %s254 = sand.u32 %s133, 1
        %s255 = scalar_lea.sflag [#allocation9], %s254
        %s256 = sand.u32 %s133, 1
        %s257 = smul.addr %s256, 8
        %s258 = scalar_lea.vmem [#allocation8], %s257
        %v259 = vld [vmem:[%s226] sm:$0x3]
        %vm260 = vcmp.ne.s32.totalorder %v259, 255
        %v261 = vsel %vm260, %v259, 0
        %v262 = vld [vmem:[%s217] sm:$0x3]
        %s263 = scalar_lea.vmem %s217, 2 [#allocation2]
        %v264 = vld [vmem:[%s263] sm:$0x3]
        %v265 = vmax.f32 %v262, %v264
        %s266 = scalar_lea.vmem %s217, 4 [#allocation2]
        %v267 = vld [vmem:[%s266] sm:$0x3]
        %v268 = vmax.f32 %v265, %v267
        %s269 = scalar_lea.vmem %s217, 6 [#allocation2]
        %v270 = vld [vmem:[%s269] sm:$0x3]
        %v271 = vmax.f32 %v268, %v270
        %v272 = vsub.f32 %v262, %v271
        %v273 = vmul.f32 %v272, 1.442695
        %v274 = vpow.pop %v273
        %v275 = vadd.f32 %v274, 0.0
        %vm276 = vcmp.eq.s32.totalorder %v261, 0
        %v277 = vsel %vm276, %v262, 0.0
        %v278 = vsub.f32 %v264, %v271
        %v279 = vmul.f32 %v278, 1.442695
        %v280 = vpow.pop %v279
        %v281 = vadd.f32 %v275, %v280
        %vm282 = vcmp.eq.s32.totalorder %v261, 1
        %v283 = vsel %vm282, %v264, %v277
        %v284 = vsub.f32 %v267, %v271
        %v285 = vmul.f32 %v284, 1.442695
        %v286 = vpow.pop %v285
        %v287 = vadd.f32 %v281, %v286
        %vm288 = vcmp.eq.s32.totalorder %v261, 2
        %v289 = vsel %vm288, %v267, %v283
        %v290 = vsub.f32 %v270, %v271
        %v291 = vmul.f32 %v290, 1.442695
        %v292 = vpow.pop %v291
        %v293 = vadd.f32 %v287, %v292
        %vm294 = vcmp.eq.s32.totalorder %v261, 3
        %v295 = vsel %vm294, %v270, %v289
        %v296 = vsub.f32 %v271, %v295
        %v297 = vlog2.pop %v293
        %v298 = vmul.f32 %v297, 0.6931472
        %v299 = vadd.f32 %v296, %v298
        %v300 = vmax.f32 %v299, 0.0
        %v301 = vsel %vm260, %v300, -1.0
        %302 = vst [vmem:[%s251] sm:$0x3] %v301
        %v303 = vsel %vm260, 1, 0
        %v304 = vcvt.s32.f32 %v303
        %v305 = vsel %vm260, %v300, 0.0
        %vm306 = vcmp.ge.f32.partialorder %v300, 0.51082563
        %vm307 = vmand %vm260, %vm306
        %v308 = vsel %vm307, 1, 0
        %v309 = vcvt.s32.f32 %v308
        %vm310 = vcmask 1041408
        %v311 = vsel %vm310, %v309, 0.0
        %v312 = vrot.slane %v311, 4
        %v313 = vadd.f32 %v311, %v312
        %v314 = vrot.slane %v313, 2
        %v315 = vadd.f32 %v313, %v314
        %v316 = vrot.slane %v315, 1
        %v317 = vadd.f32 %v315, %v316
        %318 = vst [vmem:[%s258] sm:$0x1] %v317
        %v319 = vsel %vm307, %v305, 0.0
        %v320 = vsel %vm310, %v319, 0.0
        %v321 = vrot.slane %v320, 4
        %v322 = vadd.f32 %v320, %v321
        %v323 = vrot.slane %v322, 2
        %v324 = vadd.f32 %v322, %v323
        %v325 = vrot.slane %v324, 1
        %v326 = vadd.f32 %v324, %v325
        %327 = vst [vmem:[%s258 + $0x1] sm:$0x1] %v326
        %v328 = vsel %vm310, %v304, 0.0
        %v329 = vrot.slane %v328, 4
        %v330 = vadd.f32 %v328, %v329
        %v331 = vrot.slane %v330, 2
        %v332 = vadd.f32 %v330, %v331
        %v333 = vrot.slane %v332, 1
        %v334 = vadd.f32 %v332, %v333
        %335 = vst [vmem:[%s258 + $0x2] sm:$0x1] %v334
        %v336 = vsel %vm310, %v305, 0.0
        %v337 = vrot.slane %v336, 4
        %v338 = vadd.f32 %v336, %v337
        %v339 = vrot.slane %v338, 2
        %v340 = vadd.f32 %v338, %v339
        %v341 = vrot.slane %v340, 1
        %v342 = vadd.f32 %v340, %v341
        %343 = vst [vmem:[%s258 + $0x3] sm:$0x1] %v342
        %344 = vst [vmem:[%s258 + $0x4] sm:$0xf] 0.0
        %s345 = sand.u32 %s105, 1
        %s346 = scalar_lea.sflag [#allocation4], %s345
        %s347 = sand.u32 %s105, 1
        %s348 = smul.addr %s347, 2
        %s349 = scalar_lea.vmem [#allocation7], %s348
        %s350 = sand.u32 %s133, 1
        %s351 = scalar_lea.sflag [#allocation9], %s350
        %s352 = sand.u32 %s133, 1
        %s353 = smul.addr %s352, 8
        %s354 = scalar_lea.vmem [#allocation8], %s353
        // Predicated region
        $region37: #{tpu_custom_call.1} parent=27 // pred_check
          %p355 = pneg %p115
        $region38: #{tpu_custom_call.1} parent=27 // pred_check_branch
          %357 = sbr.rel (%p355) target = $region40
        $region39: #{tpu_custom_call.1} parent=27 // pred_region
          %s359 = ssub.s32 32, 32
          %360 = vsyncadd %s346, %s359
          %s361 = sadd.s32 %s32, %s31
          %s362 = smul.addr %s361, 32
          %s363 = scalar_lea.hbm %s2, %s362
          %s365 = sshll.u32 %s349, 4
          %s366 = int_to_ptr.vmem [resolvable:$true] %s365
          %368 = dma.vmem_to_hbm [thread:$0]  %s366, 32, %s363, %s346
        $region40: #{tpu_custom_call.1} parent=27 // pred_fallthru
          _
        // Predicated region
        $region41: #{tpu_custom_call.1} parent=27 // pred_check
          %p369 = pneg %p143
        $region42: #{tpu_custom_call.1} parent=27 // pred_check_branch
          %371 = sbr.rel (%p369) target = $region44
        $region43: #{tpu_custom_call.1} parent=27 // pred_region
          %s373 = ssub.s32 128, 128
          %374 = vsyncadd %s351, %s373
          %s375 = sadd.s32 %s32, %s31
          %s376 = smul.addr %s375, 128
          %s377 = scalar_lea.hbm %s3, %s376
          %s379 = sshll.u32 %s354, 4
          %s380 = int_to_ptr.vmem [resolvable:$true] %s379
          %382 = dma.vmem_to_hbm [thread:$0]  %s380, 128, %s377, %s351
        $region44: #{tpu_custom_call.1} parent=27 // pred_fallthru
          _
      $region28: #{tpu_custom_call.1} parent=5 // pred_fallthru
        _
      %p383 = scmp.le.s32.totalorder 2, %s22
      // Predicated region
      $region45: #{tpu_custom_call.1} parent=5 // pred_check
        %p384 = pneg %p383
      $region46: #{tpu_custom_call.1} parent=5 // pred_check_branch
        %386 = sbr.rel (%p384) target = $region48
      $region47: #{tpu_custom_call.1} parent=5 // pred_region
        %s387 = ssub.s32 %s22, 2
        // Predicated region
        $region49: #{tpu_custom_call.1} parent=47 // pred_check
          %p388 = pneg %p121
        $region50: #{tpu_custom_call.1} parent=47 // pred_check_branch
          %390 = sbr.rel (%p388) target = $region52
        $region51: #{tpu_custom_call.1} parent=47 // pred_region
          %s391 = sand.u32 %s106, 1
          %s392 = scalar_lea.sflag [#allocation4], %s391
          %s393 = sand.u32 %s106, 1
          %s394 = smul.addr %s393, 2
          %s395 = scalar_lea.vmem [#allocation7], %s394
          %396 = dma.done %s392, 32
        $region52: #{tpu_custom_call.1} parent=47 // pred_fallthru
          _
        // Predicated region
        $region53: #{tpu_custom_call.1} parent=47 // pred_check
          %p397 = pneg %p149
        $region54: #{tpu_custom_call.1} parent=47 // pred_check_branch
          %399 = sbr.rel (%p397) target = $region56
        $region55: #{tpu_custom_call.1} parent=47 // pred_region
          %s400 = sand.u32 %s134, 1
          %s401 = scalar_lea.sflag [#allocation9], %s400
          %s402 = sand.u32 %s134, 1
          %s403 = smul.addr %s402, 8
          %s404 = scalar_lea.vmem [#allocation8], %s403
          %405 = dma.done %s401, 128
        $region56: #{tpu_custom_call.1} parent=47 // pred_fallthru
          _
      $region48: #{tpu_custom_call.1} parent=5 // pred_fallthru
        _
    $region6: #{tpu_custom_call.1} parent=1 // loop_footer
      %s26 = sadd.s32 1, %s22
    $region7: #{tpu_custom_call.1} parent=1 // loop_footer_branch
      %21 = sbr.rel target = $region3
    $region8: #{tpu_custom_call.1} parent=1 // loop_exit
      _
    %406 = vsyncpa [#allocation3], 1
    %s407 = scalar_lea.sflag [#allocation3], 1
    %408 = vsyncpa %s407, 1
    %409 = vsyncpa [#allocation6], 1
    %s410 = scalar_lea.sflag [#allocation6], 1
    %411 = vsyncpa %s410, 1
    %412 = vsyncpa [#allocation4], 1
    %s413 = scalar_lea.sflag [#allocation4], 1
    %414 = vsyncpa %s413, 1
    %415 = vsyncpa [#allocation9], 1
    %s416 = scalar_lea.sflag [#allocation9], 1
    %417 = vsyncpa %s416, 1

</llo_original>
